<compile_context>
chip_gen: v7x
topology: tpu7x:2x2x1
jax: 0.10.0
libtpu: 0.0.40
codegen_flags: <defaults>
</compile_context>

<pallas_src>
import functools
import math

import jax
import jax.numpy as jnp
from jax import lax
from jax.experimental import pallas as pl
from jax.experimental.pallas import tpu as pltpu


# ----------------------------- in-kernel helpers -----------------------------


def _expand_pe(pe, x_shape):
    """Replicate a (TS, D) pe tile to match the x block.

    3-D block (TS, B, D): broadcast over the batch (sublane) dim — free.
    2-D block (TS*B, D): x was collapsed from (S, B, D) to (S*B, D), so B
    consecutive rows share one position -> repeat each pe row B times.
    """
    if len(x_shape) == 3:
        return pe[:, None, :]
    ts, d = pe.shape
    b = x_shape[0] // ts
    if b == 1:
        return pe
    return jnp.broadcast_to(pe[:, None, :], (ts, b, d)).reshape(x_shape)


def _keep_mask(shape, base_u32, seed_u32, drop_threshold_24):
    """Counter-based keep mask (murmur3 fmix32 of global element id + seed).

    Plain jnp ops only -> lowers on Mosaic (VPU) and also runs under TPU
    interpret mode on CPU (pltpu.prng_seed has no CPU lowering). Block offset
    enters through the element id and the seed through the hash, so distinct
    (seed, block) pairs give independent-looking streams.
    """
    eid = None
    for ax, stride in enumerate(pl.strides_from_shape(shape)):
        term = lax.broadcasted_iota(jnp.int32, shape, ax) * jnp.int32(stride)
        eid = term if eid is None else eid + term
    h = eid.astype(jnp.uint32) + base_u32
    h = h + seed_u32 * jnp.uint32(0x9E3779B1)
    h = h ^ (h >> jnp.uint32(16))
    h = h * jnp.uint32(0x85EBCA6B)
    h = h ^ (h >> jnp.uint32(13))
    h = h * jnp.uint32(0xC2B2AE35)
    h = h ^ (h >> jnp.uint32(16))
    # Keep with probability ~(1 - p): compare top 24 bits against round(p*2^24).
    return (h >> jnp.uint32(8)) >= jnp.uint32(drop_threshold_24)


# ----------------------------- kernels ---------------------------------------


def _pe_add_kernel(x_ref, pe_ref, o_ref):
    y = x_ref[...] + _expand_pe(pe_ref[...], x_ref.shape)
    o_ref[...] = y.astype(o_ref.dtype)


def _pe_add_dropout_kernel(seed_ref, x_ref, pe_ref, o_ref, *, p):
    y = x_ref[...] + _expand_pe(pe_ref[...], x_ref.shape)

    block_elems = math.prod(x_ref.shape)
    base = pl.program_id(0).astype(jnp.uint32) * jnp.uint32(block_elems & 0xFFFFFFFF)
    seed_u32 = seed_ref[0].astype(jnp.uint32)
    drop_thr = int(round(p * float(1 << 24)))
    keep = _keep_mask(x_ref.shape, base, seed_u32, drop_thr)

    # dtype-matched constants: no f32 promotion / extra vreg pressure for bf16.
    scale = jnp.asarray(1.0 / (1.0 - p), y.dtype)
    zero = jnp.zeros((), y.dtype)
    o_ref[...] = jnp.where(keep, y * scale, zero).astype(o_ref.dtype)


# ----------------------------- host-side setup --------------------------------


def build_pe(d_model, max_len=5000):
    """Replicates PositionalEncoding.__init__'s `pe` buffer as (max_len, d_model)."""
    position = jnp.arange(max_len, dtype=jnp.float32)[:, None]
    div_term = jnp.exp(jnp.arange(0, d_model, 2, dtype=jnp.float32)
                       * (-math.log(10000.0) / d_model))
    pe = jnp.zeros((max_len, d_model), jnp.float32)
    pe = pe.at[:, 0::2].set(jnp.sin(position * div_term))
    pe = pe.at[:, 1::2].set(jnp.cos(position * div_term))
    return pe


def prepare_pe(pe, seq_len, dtype):
    """Slice / zero-pad / cast pe ONCE outside the jitted per-step path.

    Matches `x[:pe.size(0), :] += pe[:x.size(0), :]`: rows past max_len get 0.
    """
    max_len, d = pe.shape
    L = min(seq_len, max_len)
    pe_s = pe[:L].astype(dtype)
    if L < seq_len:
        pe_s = jnp.concatenate([pe_s, jnp.zeros((seq_len - L, d), dtype)], axis=0)
    return pe_s


def _vmem_budget_bytes():
    """Per-generation scoped-VMEM budget: v7x has 64 MiB physical VMEM, so
    keep the pipeline footprint well under that; v5e/v6e have 128 MiB."""
    try:
        kind = jax.devices()[0].device_kind.lower()
    except Exception:
        kind = ""
    return (32 << 20) if "v7" in kind else (64 << 20)


def _pick_seq_tile(S, B, D, itemsize, vmem_budget, min_blocks=2):
    """VMEM-byte-aware seq tile.

    Targets ~budget/8 bytes per x block (2 bufs for x + 2 for out + pe +
    headroom keeps the double-buffered pipeline alive), rounds rows to a
    multiple of 8, and prefers >= min_blocks grid steps (when S allows) so the
    'parallel' grid axis can shard across both v7x TensorCores.
    """
    bytes_per_pos = max(1, B * D * itemsize)
    ts = max(8, (vmem_budget // 8) // bytes_per_pos)
    ts = max(8, (ts // 8) * 8)
    if S >= min_blocks * 8:
        cap = max(8, ((S + min_blocks - 1) // min_blocks // 8) * 8)
        ts = min(ts, cap)
    return S if ts >= S else ts


# ----------------------------- wrapper ----------------------------------------


@functools.partial(jax.jit, static_argnames=("p", "train"))
def positional_encoding(x, pe_s, seed, *, p=0.2, train=False):
    """x: (S, B, D) seq-first; pe_s: (S, D) already in x.dtype.

    Returns x + pe (broadcast over batch), with inverted dropout when
    train=True. PyTorch mutates x in place; here the input buffer is aliased
    to the output instead, so forward-pass values are identical.
    """
    S, B, D = x.shape
    itemsize = jnp.dtype(x.dtype).itemsize
    vmem_budget = _vmem_budget_bytes()
    TS = _pick_seq_tile(S, B, D, itemsize, vmem_budget)
    grid = (pl.cdiv(S, TS),)  # possibly-partial last block; stores are masked

    # Layout: aligned (B, D) -> natural 3-D blocks (zero-relayout pe broadcast);
    # otherwise collapse to a contiguous 2-D (S*B, D) view so rows -> sublanes
    # and D -> lanes (lane-dense stores, no padded (8,128) vreg waste).
    use_3d = (B % 8 == 0) and (D % 128 == 0)
    if use_3d:
        x_op = x
        x_spec = pl.BlockSpec((TS, B, D), lambda i: (i, 0, 0))
        out_shape = jax.ShapeDtypeStruct((S, B, D), x.dtype)
    else:
        x_op = x.reshape(S * B, D)  # free view: x is contiguous in (S, B, D)
        x_spec = pl.BlockSpec((TS * B, D), lambda i: (i, 0))
        out_shape = jax.ShapeDtypeStruct((S * B, D), x.dtype)
    pe_spec = pl.BlockSpec((TS, D), lambda i: (i, 0))

    cparams = pltpu.CompilerParams(
        dimension_semantics=("parallel",),
        vmem_limit_bytes=vmem_budget,
    )
    # If DMA is still exposed for short sequences, pipeline_mode=pl.Buffered(3)
    # on x_spec is the next knob (skipped here to keep v7x VMEM headroom).

    if train and p > 0.0:
        seed_arr = jnp.asarray(seed, jnp.int32).reshape((1,))
        out = pl.pallas_call(
            functools.partial(_pe_add_dropout_kernel, p=p),
            out_shape=out_shape,
            grid=grid,
            in_specs=[pl.BlockSpec(memory_space=pltpu.MemorySpace.SMEM),
                      x_spec, pe_spec],
            out_specs=x_spec,
            input_output_aliases={1: 0},   # x (input 1) aliases the output
            compiler_params=cparams,
        )(seed_arr, x_op, pe_s)
    else:
        out = pl.pallas_call(
            _pe_add_kernel,
            out_shape=out_shape,
            grid=grid,
            in_specs=[x_spec, pe_spec],
            out_specs=x_spec,
            input_output_aliases={0: 0},   # in-place += semantics
            compiler_params=cparams,
        )(x_op, pe_s)

    return out if use_3d else out.reshape(S, B, D)


# ------------------------------- main ------------------------------------------


if __name__ == "__main__":
    S, B, D = 8, 2, 32           # seq_len=8, batch=2, d_model=32
    P = 0.2

    key = jax.random.PRNGKey(0)
    x = jax.random.normal(key, (S, B, D), jnp.float32)
    pe = build_pe(D, max_len=5000)
    pe_s = prepare_pe(pe, S, x.dtype)

    # Eval mode (dropout is identity): verify against a pure-JAX reference.
    y = positional_encoding(x, pe_s, jnp.int32(0), p=P, train=False)
    jax.block_until_ready(y)
    ref = x + pe[:S][:, None, :]
    assert y.shape == (S, B, D)
    assert jnp.allclose(y, ref, atol=1e-6, rtol=1e-6)

    # Training mode: in-kernel counter-hash dropout with inverted scaling 1/(1-p).
    y_tr = positional_encoding(x, pe_s, jnp.int32(123), p=P, train=True)
    jax.block_until_ready(y_tr)
    assert y_tr.shape == (S, B, D)
    assert bool(jnp.all(jnp.isfinite(y_tr)))
    kept = y_tr != 0.0
    # Kept entries equal ref / (1 - p); dropped entries are exactly zero.
    assert jnp.allclose(jnp.where(kept, y_tr * (1.0 - P), 0.0),
                        jnp.where(kept, ref, 0.0), atol=1e-5, rtol=1e-5)
    keep_frac = float(jnp.mean(kept.astype(jnp.float32)))
    assert 0.6 < keep_frac < 0.95, keep_frac   # ~0.8 expected

    print("KERNEL_OK")
</pallas_src>

<mosaic_0001>
module attributes {stable_mosaic.version = 11 : i64} {
  func.func @_pe_add_kernel(%arg0: i32, %arg1: memref<16x32xf32, #tpu.memory_space<vmem>>, %arg2: memref<8x32xf32, #tpu.memory_space<vmem>>, %arg3: memref<16x32xf32, #tpu.memory_space<vmem>>) attributes {dimension_semantics = [#tpu.dimension_semantics<parallel>], iteration_bounds = array<i64: 1>, scalar_prefetch = 0 : i64, scratch_operands = 0 : i64, tpu.core_type = #tpu.core_type<tc>, window_params = [{transform_indices = @transform_0, window_bounds = array<i64: 16, 32>}, {transform_indices = @transform_1, window_bounds = array<i64: 8, 32>}, {transform_indices = @transform_2, window_bounds = array<i64: 16, 32>}]} {
    %c0 = arith.constant 0 : index
    %c0_0 = arith.constant 0 : index
    %0 = vector.load %arg1[%c0, %c0_0] : memref<16x32xf32, #tpu.memory_space<vmem>>, vector<16x32xf32>
    %c0_1 = arith.constant 0 : index
    %c0_2 = arith.constant 0 : index
    %1 = vector.load %arg2[%c0_1, %c0_2] : memref<8x32xf32, #tpu.memory_space<vmem>>, vector<8x32xf32>
    %2 = vector.shape_cast %1 : vector<8x32xf32> to vector<8x1x32xf32>
    %3 = vector.shape_cast %2 : vector<8x1x32xf32> to vector<8x1x32xf32>
    %4 = vector.broadcast %3 : vector<8x1x32xf32> to vector<8x2x32xf32>
    %5 = vector.shape_cast %4 : vector<8x2x32xf32> to vector<16x32xf32>
    %6 = arith.addf %0, %5 : vector<16x32xf32>
    %c0_3 = arith.constant 0 : index
    %c0_4 = arith.constant 0 : index
    %7 = vector.load %arg3[%c0_3, %c0_4] : memref<16x32xf32, #tpu.memory_space<vmem>>, vector<16x32xf32>
    tpu.vector_store %arg3[%c0_3, %c0_4], %6 {strides = array<i32>} : memref<16x32xf32, #tpu.memory_space<vmem>>, vector<16x32xf32>,
    return
  }
  func.func @transform_0(%arg0: i32) -> (i32, i32) {
    %c0_i32 = arith.constant 0 : i32
    %c0_i32_0 = arith.constant 0 : i32
    return %arg0, %c0_i32 : i32, i32
  }
  func.func @transform_1(%arg0: i32) -> (i32, i32) {
    %c0_i32 = arith.constant 0 : i32
    %c0_i32_0 = arith.constant 0 : i32
    return %arg0, %c0_i32 : i32, i32
  }
  func.func @transform_2(%arg0: i32) -> (i32, i32) {
    %c0_i32 = arith.constant 0 : i32
    %c0_i32_0 = arith.constant 0 : i32
    return %arg0, %c0_i32 : i32, i32
  }
}

</mosaic_0001>

<llo_original>
// kernel: positional_encoding.1
$region0: #{positional_encoding.1}
  #allocation0 [shape = 'u32[]', space=smem, size = 0x4, offset = 0x4, fixed_abs, tag = 'smem constant byte address 0x4 - core index']
  #allocation1 [shape = 'u32[144,128]{1,0:T(1,128)}', space=vmem, size = 0x12000, scoped, tag = 'internal scratch']
  %s0 = inlined_call_operand.hbm [shape: f32[16,32], index: 0, kind: input, shape index: {}, may-alias: {0,2}]
  %s1 = inlined_call_operand.hbm [shape: f32[8,32], index: 1, kind: input, shape index: {}]
  %s2 = inlined_call_operand.hbm [shape: f32[16,32], index: 2, kind: output, shape index: {}, may-alias: {0,2}]
  %s3 = sld [smem:[#allocation0]]
  $region26: #{positional_encoding.1} parent=0
    _
  %s5 = ssub.s32 1, %s3
  %s6 = scalar_select 0, %s5, %s3
  $region1: #{positional_encoding.1} parent=0
    #allocation2 [shape = 'u8[8192]{0}', space=vmem, size = 0x2000, scoped, tag = 'input window, operand 0, single buffered']
    #allocation3 [shape = 's32[1]{0}', space=sflag, size = 0x4, scoped, tag = 'scoped memory for positional_encoding.1']
    #allocation4 [shape = 's32[1]{0}', space=sflag, size = 0x4, scoped, tag = 'scoped memory for positional_encoding.1']
    #allocation5 [shape = 'u8[4096]{0}', space=vmem, size = 0x1000, scoped, tag = 'input window, operand 1, single buffered']
    #allocation6 [shape = 's32[1]{0}', space=sflag, size = 0x4, scoped, tag = 'scoped memory for positional_encoding.1']
    #allocation7 [shape = 'u8[8192]{0}', space=vmem, size = 0x2000, scoped, tag = 'output window, operand 0, single buffered']
    %7 = vsyncpa [#allocation3], 0
    %8 = vsyncpa [#allocation6], 0
    %9 = vsyncpa [#allocation4], 0
    // Predicated region
    $region2: #{positional_encoding.1} parent=1 // pred_check
      _
    $region3: #{positional_encoding.1} parent=1 // pred_check_branch
      %11 = sbr.rel (0) target = $region5
    $region4: #{positional_encoding.1} parent=1 // pred_region
      %s13 = ssub.s32 256, 256
      %14 = vsyncadd [#allocation3], %s13
      %s15 = sshll.u32 [#allocation2], 4
      %s16 = int_to_ptr.vmem [resolvable:$true] %s15
      %21 = dma.hbm_to_vmem [thread:$0]  %s0, 256, %s16, [#allocation3], 128, 128, 8
    $region5: #{positional_encoding.1} parent=1 // pred_fallthru
      _
    // Predicated region
    $region6: #{positional_encoding.1} parent=1 // pred_check
      _
    $region7: #{positional_encoding.1} parent=1 // pred_check_branch
      %23 = sbr.rel (0) target = $region9
    $region8: #{positional_encoding.1} parent=1 // pred_region
      %s25 = ssub.s32 128, 128
      %26 = vsyncadd [#allocation6], %s25
      %s28 = sshll.u32 [#allocation5], 4
      %s29 = int_to_ptr.vmem [resolvable:$true] %s28
      %31 = dma.hbm_to_vmem [thread:$0]  %s1, 128, %s29, [#allocation6]
    $region9: #{positional_encoding.1} parent=1 // pred_fallthru
      _
    // Predicated region
    $region10: #{positional_encoding.1} parent=1 // pred_check
      _
    $region11: #{positional_encoding.1} parent=1 // pred_check_branch
      %33 = sbr.rel (0) target = $region13
    $region12: #{positional_encoding.1} parent=1 // pred_region
      %34 = dma.done [#allocation3], 256
    $region13: #{positional_encoding.1} parent=1 // pred_fallthru
      _
    // Predicated region
    $region14: #{positional_encoding.1} parent=1 // pred_check
      _
    $region15: #{positional_encoding.1} parent=1 // pred_check_branch
      %36 = sbr.rel (0) target = $region17
    $region16: #{positional_encoding.1} parent=1 // pred_region
      %37 = dma.done [#allocation6], 128
    $region17: #{positional_encoding.1} parent=1 // pred_fallthru
      _
    %v38 = vld [vmem:[#allocation2] sm:$0xff]
    %v39 = vld [vmem:[#allocation2 + $0x8] sm:$0xff]
    %v40 = vld [vmem:[#allocation5] sm:$0xff]
    %v42 = vcombine.high %v40, %v40
    %v44 = vunpack.c.l.s4 1966171168
    %v45 = vunpack.c.0.s8 %v44
    %v46 = vlaneseq
    %v47 = vshrl.u32 %v46, 7
    %v48 = vsub.s32 %v45, %v47
    %v49 = vrot.slane %v40, %v48
    %v51 = vunpack.c.l.s4 1966171168
    %v52 = vunpack.c.0.s8 %v51
    %v53 = vlaneseq
    %v54 = vshrl.u32 %v53, 7
    %v55 = vsub.s32 %v52, %v54
    %v56 = vrot.slane %v42, %v55
    %v57 = vcombine.high %v49, %v49
    %v58 = vcombine.high %v56, %v56
    %v60 = vunpack.c.l.s4 1966171168
    %v61 = vunpack.c.0.s8 %v60
    %v62 = vlaneseq
    %v63 = vshrl.u32 %v62, 7
    %v64 = vsub.s32 %v61, %v63
    %v65 = vrot.slane %v49, %v64
    %v67 = vunpack.c.l.s4 1966171168
    %v68 = vunpack.c.0.s8 %v67
    %v69 = vlaneseq
    %v70 = vshrl.u32 %v69, 7
    %v71 = vsub.s32 %v68, %v70
    %v72 = vrot.slane %v56, %v71
    %v74 = vunpack.c.l.s4 1966171168
    %v75 = vunpack.c.0.s8 %v74
    %v76 = vlaneseq
    %v77 = vshrl.u32 %v76, 7
    %v78 = vsub.s32 %v75, %v77
    %v79 = vrot.slane %v57, %v78
    %v81 = vunpack.c.l.s4 1966171168
    %v82 = vunpack.c.0.s8 %v81
    %v83 = vlaneseq
    %v84 = vshrl.u32 %v83, 7
    %v85 = vsub.s32 %v82, %v84
    %v86 = vrot.slane %v58, %v85
    %v87 = vcombine.high %v65, %v65
    %v88 = vcombine.high %v72, %v72
    %v89 = vcombine.high %v79, %v79
    %v90 = vcombine.high %v86, %v86
    %v91 = vlaneseq
    %v92 = vshrl.u32 %v91, 7
    %v93 = vsub.s32 0, %v92
    %v94 = vrot.slane %v65, %v93
    %v95 = vlaneseq
    %v96 = vshrl.u32 %v95, 7
    %v97 = vsub.s32 0, %v96
    %v98 = vrot.slane %v79, %v97
    %v99 = vlaneseq
    %v100 = vshrl.u32 %v99, 7
    %v101 = vsub.s32 0, %v100
    %v102 = vrot.slane %v87, %v101
    %v103 = vlaneseq
    %v104 = vshrl.u32 %v103, 7
    %v105 = vsub.s32 0, %v104
    %v106 = vrot.slane %v89, %v105
    %v107 = vlaneseq
    %v108 = vshrl.u32 %v107, 7
    %v109 = vsub.s32 0, %v108
    %v110 = vrot.slane %v72, %v109
    %v111 = vlaneseq
    %v112 = vshrl.u32 %v111, 7
    %v113 = vsub.s32 0, %v112
    %v114 = vrot.slane %v86, %v113
    %v115 = vlaneseq
    %v116 = vshrl.u32 %v115, 7
    %v117 = vsub.s32 0, %v116
    %v118 = vrot.slane %v88, %v117
    %v119 = vlaneseq
    %v120 = vshrl.u32 %v119, 7
    %v121 = vsub.s32 0, %v120
    %v122 = vrot.slane %v90, %v121
    %v123 = vcombine.low %v94, %v98
    %v124 = vcombine.low %v102, %v106
    %v126 = vunpack.c.l.s4 1983009808
    %v127 = vunpack.c.0.s8 %v126
    %v128 = vlaneseq
    %v129 = vshrl.u32 %v128, 7
    %v130 = vsub.s32 %v127, %v129
    %v131 = vrot.slane %v123, %v130
    %v133 = vunpack.c.l.s4 1983009808
    %v134 = vunpack.c.0.s8 %v133
    %v135 = vlaneseq
    %v136 = vshrl.u32 %v135, 7
    %v137 = vsub.s32 %v134, %v136
    %v138 = vrot.slane %v124, %v137
    %v139 = vcombine.low %v131, %v138
    %v140 = vcombine.low %v110, %v114
    %v141 = vcombine.low %v118, %v122
    %v143 = vunpack.c.l.s4 1983009808
    %v144 = vunpack.c.0.s8 %v143
    %v145 = vlaneseq
    %v146 = vshrl.u32 %v145, 7
    %v147 = vsub.s32 %v144, %v146
    %v148 = vrot.slane %v140, %v147
    %v150 = vunpack.c.l.s4 1983009808
    %v151 = vunpack.c.0.s8 %v150
    %v152 = vlaneseq
    %v153 = vshrl.u32 %v152, 7
    %v154 = vsub.s32 %v151, %v153
    %v155 = vrot.slane %v141, %v154
    %v156 = vcombine.low %v148, %v155
    %v159 = vadd.f32 %v38, %v139
    %v160 = vadd.f32 %v39, %v156
    %vm161 = vcmask 261120
    %162 = vst.msk [vmem:[#allocation7] sm:$0xff] %vm161, %v159
    %163 = vst.msk [vmem:[#allocation7 + $0x8] sm:$0xff] %vm161, %v160
    // Predicated region
    $region18: #{positional_encoding.1} parent=1 // pred_check
      _
    $region19: #{positional_encoding.1} parent=1 // pred_check_branch
      %165 = sbr.rel (0) target = $region21
    $region20: #{positional_encoding.1} parent=1 // pred_region
      %s167 = ssub.s32 256, 256
      %168 = vsyncadd [#allocation4], %s167
      %s169 = sshll.u32 [#allocation7], 4
      %s170 = int_to_ptr.vmem [resolvable:$true] %s169
      %175 = dma.vmem_to_hbm [thread:$0]  %s170, 256, %s2, [#allocation4], 128, 128, 8
    $region21: #{positional_encoding.1} parent=1 // pred_fallthru
      _
    // Predicated region
    $region22: #{positional_encoding.1} parent=1 // pred_check
      _
    $region23: #{positional_encoding.1} parent=1 // pred_check_branch
      %177 = sbr.rel (0) target = $region25
    $region24: #{positional_encoding.1} parent=1 // pred_region
      %178 = dma.done [#allocation4], 256
    $region25: #{positional_encoding.1} parent=1 // pred_fallthru
      _
    %179 = vsyncpa [#allocation3], 1
    %180 = vsyncpa [#allocation6], 1
    %181 = vsyncpa [#allocation4], 1

</llo_original>
